<compile_context>
chip_gen: v7x
topology: tpu7x:2x2x1
jax: 0.10.0
libtpu: 0.0.40
codegen_flags: <defaults>
</compile_context>

<pallas_src>
import functools

import numpy as np

import jax
import jax.numpy as jnp
from jax.experimental import pallas as pl
from jax.experimental.pallas import tpu as pltpu


def _single_grad_kernel(wph_ref, wmh_ref, wpv_ref, wmv_ref, ir_ref, fus_ref, out_ref,
                        *, W, HW):
    """ir_ref/fus_ref: (tb, H*W) VMEM blocks of row-major-flattened images.
    w*_ref: (1, H*W) f32 reflect-border weights (broadcast over the sublane axis).
    out_ref: (1, 1, H*W) f32 per-block partial sums of |16 * laplacian(ir - fus)|."""
    # Laplacian is linear: run the stencil once, on the difference (compute in f32).
    d = ir_ref[...].astype(jnp.float32) - fus_ref[...].astype(jnp.float32)   # (tb, HW)

    # Horizontal 3-tap with reflect border. pltpu.roll(x, s, axis=1)[f] == x[f - s]
    # (circular, independently per sublane row == per image), so
    #   p[f] = d[f-1],  m[f] = d[f+1].
    # The weights are 1 in the interior; at the column borders they zero the wrapped /
    # row-crossing neighbor and double the reflected in-bounds one.
    p = pltpu.roll(d, 1, axis=1)
    m = pltpu.roll(d, HW - 1, axis=1)
    h = d + wph_ref[...] * p + wmh_ref[...] * m

    # Vertical 3-tap with reflect border (row stride W in the flat layout).
    pv = pltpu.roll(h, W, axis=1)
    mv = pltpu.roll(h, HW - W, axis=1)
    box = h + wpv_ref[...] * pv + wmv_ref[...] * mv

    # 3x3 box-sum minus 9*center == unnormalized laplacian [[1,1,1],[1,-8,1],[1,1,1]].
    a = jnp.abs(box - 9.0 * d)

    # Reduce over the image / sublane axis only (cheap; no cross-lane XLU tree reduce,
    # no scalar broadcast). Final tiny cross-lane sum is done once in the wrapper.
    out_ref[0] = jnp.sum(a, axis=0, keepdims=True)


def _round_up(x, m):
    return ((x + m - 1) // m) * m


def _reflect_weights(H, W):
    """Per-flat-pixel weights for the +-1 / +-W rolled neighbors under reflect padding."""
    HW = H * W
    cols = np.arange(HW) % W
    rows = np.arange(HW) // W
    c0 = (cols == 0).astype(np.float32)
    cw = (cols == W - 1).astype(np.float32)
    r0 = (rows == 0).astype(np.float32)
    rh = (rows == H - 1).astype(np.float32)
    wph = (1.0 - c0 + cw)[None, :]   # weight on d[f-1]
    wmh = (1.0 + c0 - cw)[None, :]   # weight on d[f+1]
    wpv = (1.0 - r0 + rh)[None, :]   # weight on h[f-W]
    wmv = (1.0 + r0 - rh)[None, :]   # weight on h[f+W]
    return jnp.asarray(wph), jnp.asarray(wmh), jnp.asarray(wpv), jnp.asarray(wmv)


@jax.jit
def single_grad(im_fus, im_ir):
    """Equivalent of SingleGrad.forward(im_fus, im_ir) -> scalar f32 loss."""
    assert im_fus.shape == im_ir.shape
    N, C, H, W = im_fus.shape
    # torch/kornia reflect padding needs at least 2 rows and 2 cols.
    assert H >= 2 and W >= 2, "SingleGrad requires H >= 2 and W >= 2"
    NC, HW = N * C, H * W

    # Keep bf16 in HBM only if *both* inputs are bf16 (halves DMA bytes on a
    # bandwidth-bound kernel); any other dtype combination is cast to f32.
    if im_fus.dtype == jnp.bfloat16 and im_ir.dtype == jnp.bfloat16:
        cdtype = jnp.bfloat16
    else:
        cdtype = jnp.float32
    fus = im_fus.reshape(NC, HW).astype(cdtype)   # contiguous reshape: no data movement
    ir = im_ir.reshape(NC, HW).astype(cdtype)
    itemsize = jnp.dtype(cdtype).itemsize
    sub = 8 if itemsize == 4 else 16              # sublane packing of the input dtype

    # ---- tile selection against the *padded* VMEM footprint -------------------------
    hw_pad = _round_up(HW, 128)                   # lane padding of the flat pixel axis
    # Cap each input tile at ~512K elements (2 MiB f32 / 1 MiB bf16 padded): with
    # 2 inputs x 2 pipeline buffers plus ~5 full-tile f32 temporaries the kernel stays
    # around ~20 MiB, inside the 32 MiB scoped VMEM limit on every TPU generation.
    max_elems = 512 * 1024
    tb_cap = max(sub, (max_elems // hw_pad) // sub * sub)
    nc_min = _round_up(NC, sub)
    if nc_min <= tb_cap:
        if nc_min >= 2 * sub:
            # Fits one tile but spans >= 2 sublane groups: split into 2 blocks so the
            # "parallel" grid axis can shard across both v7x TensorCores (free for a
            # memory-bound kernel).
            tb = _round_up(-(-nc_min // 2), sub)
        else:
            tb = nc_min
    else:
        tb = tb_cap
    num_blocks = -(-NC // tb)
    nc_pad = num_blocks * tb
    if nc_pad != NC:
        # Zero images contribute exactly 0 to |lap(ir - fus)|, so zero-padding is exact.
        fus = jnp.pad(fus, ((0, nc_pad - NC), (0, 0)))
        ir = jnp.pad(ir, ((0, nc_pad - NC), (0, 0)))

    wph, wmh, wpv, wmv = _reflect_weights(H, W)

    kernel = functools.partial(_single_grad_kernel, W=W, HW=HW)
    w_spec = pl.BlockSpec((1, HW), lambda i: (0, 0))
    im_spec = pl.BlockSpec((tb, HW), lambda i: (i, 0))
    partials = pl.pallas_call(
        kernel,
        out_shape=jax.ShapeDtypeStruct((num_blocks, 1, HW), jnp.float32),
        grid=(num_blocks,),
        in_specs=[w_spec, w_spec, w_spec, w_spec, im_spec, im_spec],
        out_specs=pl.BlockSpec((1, 1, HW), lambda i: (i, 0, 0)),
        compiler_params=pltpu.CompilerParams(
            dimension_semantics=("parallel",),
            vmem_limit_bytes=32 * 1024 * 1024,
        ),
        cost_estimate=pl.CostEstimate(
            flops=14 * nc_pad * HW,
            transcendentals=0,
            bytes_accessed=(2 * nc_pad * HW * itemsize
                            + num_blocks * HW * 4 + 4 * HW * 4),
        ),
    )(wph, wmh, wpv, wmv, ir, fus)

    # Fold 1/16 (kornia-normalized kernel) and 1/n (L1Loss mean over the ORIGINAL
    # element count; padded rows contribute 0) into one scalar multiply.
    return jnp.sum(partials) / (16.0 * NC * HW)


def _reference(im_fus, im_ir):
    """Pure-JAX reference: kornia laplacian(3, reflect, normalized) on both + L1 mean."""
    k = jnp.array([[1.0, 1.0, 1.0], [1.0, -8.0, 1.0], [1.0, 1.0, 1.0]],
                  jnp.float32) / 16.0

    def lap(x):
        n, c, hh, ww = x.shape
        xp = jnp.pad(x.astype(jnp.float32),
                     ((0, 0), (0, 0), (1, 1), (1, 1)), mode="reflect")
        out = jnp.zeros((n, c, hh, ww), jnp.float32)
        for di in range(3):
            for dj in range(3):
                out = out + k[di, dj] * xp[:, :, di:di + hh, dj:dj + ww]
        return out

    return jnp.mean(jnp.abs(lap(im_ir) - lap(im_fus)))


if __name__ == "__main__":
    key = jax.random.PRNGKey(0)
    k1, k2, k3, k4 = jax.random.split(key, 4)

    # f32 path (also exercises NC zero-padding: NC=2 padded to one 8-row sublane tile).
    im_fus = jax.random.uniform(k1, (2, 1, 16, 16), dtype=jnp.float32)
    im_ir = jax.random.uniform(k2, (2, 1, 16, 16), dtype=jnp.float32)
    loss = single_grad(im_fus, im_ir)
    jax.block_until_ready(loss)
    ref = _reference(im_fus, im_ir)
    assert jnp.allclose(loss, ref, rtol=1e-5, atol=1e-5), (float(loss), float(ref))

    # bf16 path (inputs stay bf16 through HBM/DMA; all in-kernel compute is f32).
    fus16 = jax.random.uniform(k3, (2, 4, 16, 16), dtype=jnp.float32).astype(jnp.bfloat16)
    ir16 = jax.random.uniform(k4, (2, 4, 16, 16), dtype=jnp.float32).astype(jnp.bfloat16)
    loss16 = single_grad(fus16, ir16)
    jax.block_until_ready(loss16)
    ref16 = _reference(fus16.astype(jnp.float32), ir16.astype(jnp.float32))
    assert jnp.allclose(loss16, ref16, rtol=1e-4, atol=1e-5), (float(loss16), float(ref16))

    print("KERNEL_OK")
</pallas_src>

<mosaic_0001>
module attributes {stable_mosaic.version = 11 : i64} {
  func.func @_single_grad_kernel(%arg0: i32, %arg1: memref<1x256xf32, #tpu.memory_space<vmem>>, %arg2: memref<1x256xf32, #tpu.memory_space<vmem>>, %arg3: memref<1x256xf32, #tpu.memory_space<vmem>>, %arg4: memref<1x256xf32, #tpu.memory_space<vmem>>, %arg5: memref<8x256xf32, #tpu.memory_space<vmem>>, %arg6: memref<8x256xf32, #tpu.memory_space<vmem>>, %arg7: memref<1x1x256xf32, #tpu.memory_space<vmem>>) attributes {dimension_semantics = [#tpu.dimension_semantics<parallel>], iteration_bounds = array<i64: 1>, scalar_prefetch = 0 : i64, scratch_operands = 0 : i64, tpu.core_type = #tpu.core_type<tc>, window_params = [{pipeline_mode = #tpu.pipeline_mode<synchronous>, transform_indices = @transform_0, window_bounds = array<i64: 1, 256>}, {pipeline_mode = #tpu.pipeline_mode<synchronous>, transform_indices = @transform_1, window_bounds = array<i64: 1, 256>}, {pipeline_mode = #tpu.pipeline_mode<synchronous>, transform_indices = @transform_2, window_bounds = array<i64: 1, 256>}, {pipeline_mode = #tpu.pipeline_mode<synchronous>, transform_indices = @transform_3, window_bounds = array<i64: 1, 256>}, {transform_indices = @transform_4, window_bounds = array<i64: 8, 256>}, {transform_indices = @transform_5, window_bounds = array<i64: 8, 256>}, {transform_indices = @transform_6, window_bounds = array<i64: 1, 1, 256>}]} {
    %c0 = arith.constant 0 : index
    %c0_0 = arith.constant 0 : index
    %0 = vector.load %arg5[%c0, %c0_0] : memref<8x256xf32, #tpu.memory_space<vmem>>, vector<8x256xf32>
    %c0_1 = arith.constant 0 : index
    %c0_2 = arith.constant 0 : index
    %1 = vector.load %arg6[%c0_1, %c0_2] : memref<8x256xf32, #tpu.memory_space<vmem>>, vector<8x256xf32>
    %2 = arith.subf %0, %1 : vector<8x256xf32>
    %c1_i32 = arith.constant 1 : i32
    %3 = tpu.dynamic_rotate %2 by %c1_i32 dim 1 : vector<8x256xf32>, i32 -> vector<8x256xf32>
    %c255_i32 = arith.constant 255 : i32
    %4 = tpu.dynamic_rotate %2 by %c255_i32 dim 1 : vector<8x256xf32>, i32 -> vector<8x256xf32>
    %c0_3 = arith.constant 0 : index
    %c0_4 = arith.constant 0 : index
    %5 = vector.load %arg1[%c0_3, %c0_4] : memref<1x256xf32, #tpu.memory_space<vmem>>, vector<1x256xf32>
    %6 = vector.broadcast %5 : vector<1x256xf32> to vector<8x256xf32>
    %7 = arith.mulf %6, %3 : vector<8x256xf32>
    %8 = arith.addf %2, %7 : vector<8x256xf32>
    %c0_5 = arith.constant 0 : index
    %c0_6 = arith.constant 0 : index
    %9 = vector.load %arg2[%c0_5, %c0_6] : memref<1x256xf32, #tpu.memory_space<vmem>>, vector<1x256xf32>
    %10 = vector.broadcast %9 : vector<1x256xf32> to vector<8x256xf32>
    %11 = arith.mulf %10, %4 : vector<8x256xf32>
    %12 = arith.addf %8, %11 : vector<8x256xf32>
    %c16_i32 = arith.constant 16 : i32
    %13 = tpu.dynamic_rotate %12 by %c16_i32 dim 1 : vector<8x256xf32>, i32 -> vector<8x256xf32>
    %c240_i32 = arith.constant 240 : i32
    %14 = tpu.dynamic_rotate %12 by %c240_i32 dim 1 : vector<8x256xf32>, i32 -> vector<8x256xf32>
    %c0_7 = arith.constant 0 : index
    %c0_8 = arith.constant 0 : index
    %15 = vector.load %arg3[%c0_7, %c0_8] : memref<1x256xf32, #tpu.memory_space<vmem>>, vector<1x256xf32>
    %16 = vector.broadcast %15 : vector<1x256xf32> to vector<8x256xf32>
    %17 = arith.mulf %16, %13 : vector<8x256xf32>
    %18 = arith.addf %12, %17 : vector<8x256xf32>
    %c0_9 = arith.constant 0 : index
    %c0_10 = arith.constant 0 : index
    %19 = vector.load %arg4[%c0_9, %c0_10] : memref<1x256xf32, #tpu.memory_space<vmem>>, vector<1x256xf32>
    %20 = vector.broadcast %19 : vector<1x256xf32> to vector<8x256xf32>
    %21 = arith.mulf %20, %14 : vector<8x256xf32>
    %22 = arith.addf %18, %21 : vector<8x256xf32>
    %cst = arith.constant 9.000000e+00 : f32
    %23 = vector.broadcast %cst : f32 to vector<8x256xf32>
    %24 = arith.mulf %23, %2 : vector<8x256xf32>
    %25 = arith.subf %22, %24 : vector<8x256xf32>
    %26 = math.absf %25 : vector<8x256xf32>
    %cst_11 = arith.constant dense<0.000000e+00> : vector<256xf32>
    %27 = vector.multi_reduction <add>, %26, %cst_11 [0] : vector<8x256xf32> to vector<256xf32>
    %28 = vector.shape_cast %27 : vector<256xf32> to vector<1x256xf32>
    %c0_12 = arith.constant 0 : index
    %c0_13 = arith.constant 0 : index
    %c0_14 = arith.constant 0 : index
    %29 = vector.load %arg7[%c0_12, %c0_13, %c0_14] : memref<1x1x256xf32, #tpu.memory_space<vmem>>, vector<1x1x256xf32>
    %30 = vector.shape_cast %29 : vector<1x1x256xf32> to vector<1x256xf32>
    %31 = vector.shape_cast %28 : vector<1x256xf32> to vector<1x1x256xf32>
    tpu.vector_store %arg7[%c0_12, %c0_13, %c0_14], %31 {strides = array<i32>} : memref<1x1x256xf32, #tpu.memory_space<vmem>>, vector<1x1x256xf32>,
    return
  }
  func.func @transform_0(%arg0: i32) -> (i32, i32) {
    %c0_i32 = arith.constant 0 : i32
    %c0_i32_0 = arith.constant 0 : i32
    %c0_i32_1 = arith.constant 0 : i32
    return %c0_i32, %c0_i32_0 : i32, i32
  }
  func.func @transform_1(%arg0: i32) -> (i32, i32) {
    %c0_i32 = arith.constant 0 : i32
    %c0_i32_0 = arith.constant 0 : i32
    %c0_i32_1 = arith.constant 0 : i32
    return %c0_i32, %c0_i32_0 : i32, i32
  }
  func.func @transform_2(%arg0: i32) -> (i32, i32) {
    %c0_i32 = arith.constant 0 : i32
    %c0_i32_0 = arith.constant 0 : i32
    %c0_i32_1 = arith.constant 0 : i32
    return %c0_i32, %c0_i32_0 : i32, i32
  }
  func.func @transform_3(%arg0: i32) -> (i32, i32) {
    %c0_i32 = arith.constant 0 : i32
    %c0_i32_0 = arith.constant 0 : i32
    %c0_i32_1 = arith.constant 0 : i32
    return %c0_i32, %c0_i32_0 : i32, i32
  }
  func.func @transform_4(%arg0: i32) -> (i32, i32) {
    %c0_i32 = arith.constant 0 : i32
    %c0_i32_0 = arith.constant 0 : i32
    return %arg0, %c0_i32 : i32, i32
  }
  func.func @transform_5(%arg0: i32) -> (i32, i32) {
    %c0_i32 = arith.constant 0 : i32
    %c0_i32_0 = arith.constant 0 : i32
    return %arg0, %c0_i32 : i32, i32
  }
  func.func @transform_6(%arg0: i32) -> (i32, i32, i32) {
    %c0_i32 = arith.constant 0 : i32
    %c0_i32_0 = arith.constant 0 : i32
    %c0_i32_1 = arith.constant 0 : i32
    return %arg0, %c0_i32, %c0_i32_0 : i32, i32, i32
  }
}

</mosaic_0001>

<llo_original>
// kernel: single_grad.1
$region0: #{single_grad.1}
  #allocation0 [shape = 'u32[]', space=smem, size = 0x4, offset = 0x4, fixed_abs, tag = 'smem constant byte address 0x4 - core index']
  #allocation1 [shape = 'u32[144,128]{1,0:T(1,128)}', space=vmem, size = 0x12000, scoped, tag = 'internal scratch']
  %s0 = inlined_call_operand.vmem [shape: f32[1,256], index: 0, kind: input, shape index: {}]
  %s1 = inlined_call_operand.vmem [shape: f32[1,256], index: 1, kind: input, shape index: {}]
  %s2 = inlined_call_operand.vmem [shape: f32[1,256], index: 2, kind: input, shape index: {}]
  %s3 = inlined_call_operand.vmem [shape: f32[1,256], index: 3, kind: input, shape index: {}]
  %s4 = inlined_call_operand.vmem [shape: f32[8,256], index: 4, kind: input, shape index: {}]
  %s5 = inlined_call_operand.vmem [shape: f32[8,256], index: 5, kind: input, shape index: {}]
  %s6 = inlined_call_operand.vmem [shape: f32[1,1,256], index: 6, kind: output, shape index: {}]
  %s7 = sld [smem:[#allocation0]]
  $region34: #{single_grad.1} parent=0
    _
  %s9 = ssub.s32 1, %s7
  %s10 = scalar_select 0, %s9, %s7
  // Predicated region
  $region2: #{single_grad.1} parent=0 // pred_check
    _
  $region3: #{single_grad.1} parent=0 // pred_check_branch
    %12 = sbr.rel (0) target = $region5
  $region4: #{single_grad.1} parent=0 // pred_region
    _
  $region5: #{single_grad.1} parent=0 // pred_fallthru
    _
  // Predicated region
  $region6: #{single_grad.1} parent=0 // pred_check
    _
  $region7: #{single_grad.1} parent=0 // pred_check_branch
    %14 = sbr.rel (0) target = $region9
  $region8: #{single_grad.1} parent=0 // pred_region
    _
  $region9: #{single_grad.1} parent=0 // pred_fallthru
    _
  // Predicated region
  $region10: #{single_grad.1} parent=0 // pred_check
    _
  $region11: #{single_grad.1} parent=0 // pred_check_branch
    %16 = sbr.rel (0) target = $region13
  $region12: #{single_grad.1} parent=0 // pred_region
    _
  $region13: #{single_grad.1} parent=0 // pred_fallthru
    _
  // Predicated region
  $region14: #{single_grad.1} parent=0 // pred_check
    _
  $region15: #{single_grad.1} parent=0 // pred_check_branch
    %18 = sbr.rel (0) target = $region17
  $region16: #{single_grad.1} parent=0 // pred_region
    _
  $region17: #{single_grad.1} parent=0 // pred_fallthru
    _
  // Predicated region
  $region18: #{single_grad.1} parent=0 // pred_check
    _
  $region19: #{single_grad.1} parent=0 // pred_check_branch
    %20 = sbr.rel (0) target = $region21
  $region20: #{single_grad.1} parent=0 // pred_region
    _
  $region21: #{single_grad.1} parent=0 // pred_fallthru
    _
  // Predicated region
  $region22: #{single_grad.1} parent=0 // pred_check
    _
  $region23: #{single_grad.1} parent=0 // pred_check_branch
    %22 = sbr.rel (0) target = $region25
  $region24: #{single_grad.1} parent=0 // pred_region
    _
  $region25: #{single_grad.1} parent=0 // pred_fallthru
    _
  %v23 = vld [vmem:[%s4] sm:$0xff]
  %v24 = vld [vmem:[%s4 + $0x8] sm:$0xff]
  %v25 = vld [vmem:[%s5] sm:$0xff]
  %v26 = vld [vmem:[%s5 + $0x8] sm:$0xff]
  %v27 = vsub.f32 %v23, %v25
  %v28 = vsub.f32 %v24, %v26
  %29 = vrot.lane.b32.xlu0 %v27, 1
  %v30 = vpop.permute.xlu0 %29
  %31 = vrot.lane.b32.xlu0 %v28, 1
  %v32 = vpop.permute.xlu0 %31
  %v33 = vlaneseq
  %v34 = vand.u32 %v33, 127
  %vm35 = vcmp.lt.s32.totalorder %v34, 1
  %v36 = vsel %vm35, %v30, %v32
  %v37 = vsel %vm35, %v32, %v30
  %38 = vrot.lane.b32.xlu0 %v27, 127
  %v39 = vpop.permute.xlu0 %38
  %40 = vrot.lane.b32.xlu0 %v28, 127
  %v41 = vpop.permute.xlu0 %40
  %vm42 = vcmp.lt.s32.totalorder %v34, 127
  %v43 = vsel %vm42, %v39, %v41
  %v44 = vsel %vm42, %v41, %v39
  %v45 = vld [vmem:[%s0] sm:$0x3]
  %v47 = vlaneseq
  %v48 = vshrl.u32 %v47, 7
  %v49 = vsub.s32 0, %v48
  %v50 = vrot.slane %v45, %v49
  %v51 = vlaneseq
  %v52 = vshrl.u32 %v51, 7
  %v53 = vsub.s32 1, %v52
  %v54 = vrot.slane %v45, %v53
  %v57 = vmul.f32 %v50, %v37
  %v58 = vmul.f32 %v54, %v36
  %v59 = vadd.f32 %v27, %v57
  %v60 = vadd.f32 %v28, %v58
  %v61 = vld [vmem:[%s1] sm:$0x3]
  %v63 = vlaneseq
  %v64 = vshrl.u32 %v63, 7
  %v65 = vsub.s32 0, %v64
  %v66 = vrot.slane %v61, %v65
  %v67 = vlaneseq
  %v68 = vshrl.u32 %v67, 7
  %v69 = vsub.s32 1, %v68
  %v70 = vrot.slane %v61, %v69
  %v73 = vmul.f32 %v66, %v43
  %v74 = vmul.f32 %v70, %v44
  %v75 = vadd.f32 %v59, %v73
  %v76 = vadd.f32 %v60, %v74
  %77 = vrot.lane.b32.xlu0 %v75, 16
  %v78 = vpop.permute.xlu0 %77
  %79 = vrot.lane.b32.xlu0 %v76, 16
  %v80 = vpop.permute.xlu0 %79
  %vm81 = vcmp.lt.s32.totalorder %v34, 16
  %v82 = vsel %vm81, %v78, %v80
  %v83 = vsel %vm81, %v80, %v78
  %84 = vrot.lane.b32.xlu0 %v75, 112
  %v85 = vpop.permute.xlu0 %84
  %86 = vrot.lane.b32.xlu0 %v76, 112
  %v87 = vpop.permute.xlu0 %86
  %vm88 = vcmp.lt.s32.totalorder %v34, 112
  %v89 = vsel %vm88, %v85, %v87
  %v90 = vsel %vm88, %v87, %v85
  %v91 = vld [vmem:[%s2] sm:$0x3]
  %v93 = vlaneseq
  %v94 = vshrl.u32 %v93, 7
  %v95 = vsub.s32 0, %v94
  %v96 = vrot.slane %v91, %v95
  %v97 = vlaneseq
  %v98 = vshrl.u32 %v97, 7
  %v99 = vsub.s32 1, %v98
  %v100 = vrot.slane %v91, %v99
  %v103 = vmul.f32 %v96, %v83
  %v104 = vmul.f32 %v100, %v82
  %v105 = vadd.f32 %v75, %v103
  %v106 = vadd.f32 %v76, %v104
  %v107 = vld [vmem:[%s3] sm:$0x3]
  %v109 = vlaneseq
  %v110 = vshrl.u32 %v109, 7
  %v111 = vsub.s32 0, %v110
  %v112 = vrot.slane %v107, %v111
  %v113 = vlaneseq
  %v114 = vshrl.u32 %v113, 7
  %v115 = vsub.s32 1, %v114
  %v116 = vrot.slane %v107, %v115
  %v119 = vmul.f32 %v112, %v89
  %v120 = vmul.f32 %v116, %v90
  %v121 = vadd.f32 %v105, %v119
  %v122 = vadd.f32 %v106, %v120
  %v123 = vmul.f32 %v27, 9.0
  %v124 = vmul.f32 %v28, 9.0
  %v125 = vsub.f32 %v121, %v123
  %v126 = vsub.f32 %v122, %v124
  %v127 = vand.u32 2147483647, %v125
  %v128 = vand.u32 2147483647, %v126
  %v129 = vrot.slane %v127, 4
  %v130 = vadd.f32 %v127, %v129
  %v131 = vrot.slane %v130, 2
  %v132 = vadd.f32 %v130, %v131
  %v133 = vrot.slane %v132, 1
  %v134 = vadd.f32 %v132, %v133
  %v135 = vrot.slane %v128, 4
  %v136 = vadd.f32 %v128, %v135
  %v137 = vrot.slane %v136, 2
  %v138 = vadd.f32 %v136, %v137
  %v139 = vrot.slane %v138, 1
  %v140 = vadd.f32 %v138, %v139
  %v143 = vcombine.low %v134, %v140
  %v145 = vunpack.c.l.s4 1966171168
  %v146 = vunpack.c.0.s8 %v145
  %v147 = vlaneseq
  %v148 = vshrl.u32 %v147, 7
  %v149 = vsub.s32 %v146, %v148
  %v150 = vrot.slane %v143, %v149
  %v152 = vunpack.c.l.s4 1966171168
  %v153 = vunpack.c.0.s8 %v152
  %v154 = vlaneseq
  %v155 = vshrl.u32 %v154, 7
  %v156 = vsub.s32 %v153, %v155
  %v157 = vrot.slane %v150, %v156
  %v159 = vlaneseq
  %vm160 = vcmp.ge.s32.totalorder %v159, 0
  %vm161 = vcmp.lt.s32.totalorder %v159, 256
  %vm162 = vmand %vm160, %vm161
  %163 = vst.msk [vmem:[%s6] sm:$0x3] %vm162, %v157
  // Predicated region
  $region26: #{single_grad.1} parent=0 // pred_check
    _
  $region27: #{single_grad.1} parent=0 // pred_check_branch
    %165 = sbr.rel (0) target = $region29
  $region28: #{single_grad.1} parent=0 // pred_region
    _
  $region29: #{single_grad.1} parent=0 // pred_fallthru
    _
  // Predicated region
  $region30: #{single_grad.1} parent=0 // pred_check
    _
  $region31: #{single_grad.1} parent=0 // pred_check_branch
    %167 = sbr.rel (0) target = $region33
  $region32: #{single_grad.1} parent=0 // pred_region
    _
  $region33: #{single_grad.1} parent=0 // pred_fallthru
    _

</llo_original>
